<compile_context>
chip_gen: v7x
topology: tpu7x:2x2x1
jax: 0.10.0
libtpu: 0.0.40
codegen_flags: <defaults>
</compile_context>

<pallas_src>
import jax
import jax.numpy as jnp
from jax.experimental import pallas as pl
from jax.experimental.pallas import tpu as pltpu

_LANES = 128
_SUBLANES = 8
# Per-operand tile budget: 4 MiB.  Double-buffered input + output tiles
# (4 buffers) = 16 MiB.  Pinned: do not scale up with VMEM size; copy
# throughput plateaus well below this and v7x only has 64 MiB VMEM /
# 32 MiB scoped default.
_TILE_BYTES = 4 * 1024 * 1024
_VMEM_LIMIT = 32 * 1024 * 1024


def _copy_kernel(x_ref, o_ref):
    # forward() of PointDynamicLatentVariable is the identity on X.
    o_ref[...] = x_ref[...]


def _lane_dense_shape(total):
    """Widest lane-dense (rows, cols) with cols a multiple of 128 dividing total."""
    for cols in (4096, 2048, 1024, 512, 256, _LANES):
        if total % cols == 0:
            return total // cols, cols
    return None


def point_dynamic_latent_variable_forward(X, *, use_pallas=False):
    """Pallas equivalent of PointDynamicLatentVariable.forward().

    Default (use_pallas=False) is the zero-cost identity: forward() just
    returns the parameter X, which no copy kernel can ever beat.  The
    use_pallas=True path exercises a lane-dense identity-copy kernel.
    """
    if not use_pallas:
        # Hot path: forward() is the identity, so just return X (zero cost).
        return X

    orig_shape = X.shape
    total = int(X.size)
    itemsize = jnp.dtype(X.dtype).itemsize
    whole_bytes = total * itemsize

    shape2d = _lane_dense_shape(total)
    if shape2d is None:
        # TODO(synk): flat size not a multiple of 128 lanes; return the
        # identity directly rather than faking a lane-dense tiling.
        return X
    rows, cols = shape2d
    x2d = X.reshape(rows, cols)

    cost = pl.CostEstimate(
        flops=0, transcendentals=0, bytes_accessed=2 * whole_bytes
    )

    if whole_bytes <= _TILE_BYTES:
        # Whole array as a single block: one grid step, no per-step overhead.
        # Explicit vmem_limit keeps the budget deterministic across
        # generations (v5e's scoped default is only 16 MiB).
        out2d = pl.pallas_call(
            _copy_kernel,
            out_shape=jax.ShapeDtypeStruct((rows, cols), X.dtype),
            grid=(1,),
            in_specs=[pl.BlockSpec((rows, cols), lambda i: (0, 0))],
            out_specs=pl.BlockSpec((rows, cols), lambda i: (0, 0)),
            compiler_params=pltpu.CompilerParams(
                dimension_semantics=("arbitrary",),
                vmem_limit_bytes=_VMEM_LIMIT,
            ),
            cost_estimate=cost,
        )(x2d)
    else:
        # Large X: biggest lane-dense row-tile inside the pinned 4 MiB tile
        # budget, rounded down to a sublane multiple.  Tiles are independent
        # (pure copy, disjoint outputs), so the grid axis is "parallel" and
        # v7x's two TensorCores each take half the copy.
        row_bytes = cols * itemsize
        rows_per_tile = max(_SUBLANES, min(rows, _TILE_BYTES // row_bytes))
        rows_per_tile = (rows_per_tile // _SUBLANES) * _SUBLANES
        grid = (pl.cdiv(rows, rows_per_tile),)
        out2d = pl.pallas_call(
            _copy_kernel,
            out_shape=jax.ShapeDtypeStruct((rows, cols), X.dtype),
            grid=grid,
            in_specs=[pl.BlockSpec((rows_per_tile, cols), lambda i: (i, 0))],
            out_specs=pl.BlockSpec((rows_per_tile, cols), lambda i: (i, 0)),
            compiler_params=pltpu.CompilerParams(
                dimension_semantics=("parallel",),
                vmem_limit_bytes=_VMEM_LIMIT,
            ),
            cost_estimate=cost,
        )(x2d)

    return out2d.reshape(orig_shape)


class PointDynamicLatentVariablePallas:
    """Mirror of the PyTorch module: holds parameter X; forward returns it."""

    def __init__(self, n, horizon, latent_dim, X_init):
        assert X_init.shape == (n, horizon, latent_dim)
        self.n = n
        self.horizon = horizon
        self.latent_dim = latent_dim
        self.X = X_init  # the registered parameter

    def forward(self, use_pallas=False):
        # Production path: return self.X directly (identity, zero cost,
        # autodiff-friendly).  use_pallas=True exercises the copy kernel.
        return point_dynamic_latent_variable_forward(self.X, use_pallas=use_pallas)


if __name__ == "__main__":
    # Small, deterministic setup consistent with the module's __init__:
    # X_init has shape (n, horizon, latent_dim).
    n, horizon, latent_dim = 8, 4, 16
    key = jax.random.PRNGKey(0)
    X_init = jax.random.normal(key, (n, horizon, latent_dim), dtype=jnp.float32)

    module = PointDynamicLatentVariablePallas(n, horizon, latent_dim, X_init)

    # Hot path: identity (no kernel) -- the recommended production behavior.
    out_fast = module.forward(use_pallas=False)
    assert out_fast is module.X

    # Pallas path: exercise the lane-dense copy kernel once.
    out = module.forward(use_pallas=True)
    out = jax.block_until_ready(out)

    # Correctness check against the trivial reference (forward == identity on X).
    assert out.shape == (n, horizon, latent_dim)
    assert out.dtype == X_init.dtype
    assert bool(jnp.allclose(out, X_init))

    print("KERNEL_OK")
</pallas_src>

<mosaic_0001>
module attributes {stable_mosaic.version = 11 : i64} {
  func.func @_copy_kernel(%arg0: i32, %arg1: memref<1x512xf32, #tpu.memory_space<vmem>>, %arg2: memref<1x512xf32, #tpu.memory_space<vmem>>) attributes {dimension_semantics = [#tpu.dimension_semantics<arbitrary>], iteration_bounds = array<i64: 1>, scalar_prefetch = 0 : i64, scratch_operands = 0 : i64, tpu.core_type = #tpu.core_type<tc>, window_params = [{pipeline_mode = #tpu.pipeline_mode<synchronous>, transform_indices = @transform_0, window_bounds = array<i64: 1, 512>}, {pipeline_mode = #tpu.pipeline_mode<synchronous>, transform_indices = @transform_1, window_bounds = array<i64: 1, 512>}]} {
    %c0 = arith.constant 0 : index
    %c0_0 = arith.constant 0 : index
    %0 = vector.load %arg1[%c0, %c0_0] : memref<1x512xf32, #tpu.memory_space<vmem>>, vector<1x512xf32>
    %c0_1 = arith.constant 0 : index
    %c0_2 = arith.constant 0 : index
    %1 = vector.load %arg2[%c0_1, %c0_2] : memref<1x512xf32, #tpu.memory_space<vmem>>, vector<1x512xf32>
    tpu.vector_store %arg2[%c0_1, %c0_2], %0 {strides = array<i32>} : memref<1x512xf32, #tpu.memory_space<vmem>>, vector<1x512xf32>,
    return
  }
  func.func @transform_0(%arg0: i32) -> (i32, i32) {
    %c0_i32 = arith.constant 0 : i32
    %c0_i32_0 = arith.constant 0 : i32
    %c0_i32_1 = arith.constant 0 : i32
    return %c0_i32, %c0_i32_0 : i32, i32
  }
  func.func @transform_1(%arg0: i32) -> (i32, i32) {
    %c0_i32 = arith.constant 0 : i32
    %c0_i32_0 = arith.constant 0 : i32
    %c0_i32_1 = arith.constant 0 : i32
    return %c0_i32, %c0_i32_0 : i32, i32
  }
}

</mosaic_0001>

<llo_original>
// kernel: tpu_custom_call.1
$region0: #{tpu_custom_call.1}
  #allocation0 [shape = 'u32[]', space=smem, size = 0x4, offset = 0x4, fixed_abs, tag = 'smem constant byte address 0x4 - core index']
  #allocation1 [shape = 'u32[144,128]{1,0:T(1,128)}', space=vmem, size = 0x12000, scoped, tag = 'internal scratch']
  %s0 = inlined_call_operand.hbm [shape: f32[1,512], index: 0, kind: input, shape index: {}]
  %s1 = inlined_call_operand.hbm [shape: f32[1,512], index: 1, kind: output, shape index: {}]
  %s2 = sld [smem:[#allocation0]]
  $region18: #{tpu_custom_call.1} parent=0
    _
  %s4 = ssub.s32 1, %s2
  %s5 = scalar_select 0, %s4, %s2
  $region1: #{tpu_custom_call.1} parent=0
    #allocation2 [shape = 'u8[2048]{0}', space=vmem, size = 0x800, scoped, tag = 'input window, operand 0, single buffered']
    #allocation3 [shape = 's32[1]{0}', space=sflag, size = 0x4, scoped, tag = 'scoped memory for tpu_custom_call.1']
    #allocation4 [shape = 's32[1]{0}', space=sflag, size = 0x4, scoped, tag = 'scoped memory for tpu_custom_call.1']
    #allocation5 [shape = 'u8[2048]{0}', space=vmem, size = 0x800, scoped, tag = 'output window, operand 0, single buffered']
    %6 = vsyncpa [#allocation3], 0
    %7 = vsyncpa [#allocation4], 0
    // Predicated region
    $region2: #{tpu_custom_call.1} parent=1 // pred_check
      _
    $region3: #{tpu_custom_call.1} parent=1 // pred_check_branch
      %9 = sbr.rel (0) target = $region5
    $region4: #{tpu_custom_call.1} parent=1 // pred_region
      %s11 = ssub.s32 64, 64
      %12 = vsyncadd [#allocation3], %s11
      %s14 = sshll.u32 [#allocation2], 4
      %s15 = int_to_ptr.vmem [resolvable:$true] %s14
      %17 = dma.hbm_to_vmem [thread:$0]  %s0, 64, %s15, [#allocation3]
    $region5: #{tpu_custom_call.1} parent=1 // pred_fallthru
      _
    // Predicated region
    $region6: #{tpu_custom_call.1} parent=1 // pred_check
      _
    $region7: #{tpu_custom_call.1} parent=1 // pred_check_branch
      %19 = sbr.rel (0) target = $region9
    $region8: #{tpu_custom_call.1} parent=1 // pred_region
      %20 = dma.done [#allocation3], 64
    $region9: #{tpu_custom_call.1} parent=1 // pred_fallthru
      _
    %v21 = vld [vmem:[#allocation2] sm:$0xf]
    %v22 = vlaneseq
    %vm23 = vcmp.ge.s32.totalorder %v22, 0
    %vm24 = vcmp.lt.s32.totalorder %v22, 512
    %vm25 = vmand %vm23, %vm24
    %26 = vst.msk [vmem:[#allocation5] sm:$0xf] %vm25, %v21
    // Predicated region
    $region10: #{tpu_custom_call.1} parent=1 // pred_check
      _
    $region11: #{tpu_custom_call.1} parent=1 // pred_check_branch
      %28 = sbr.rel (0) target = $region13
    $region12: #{tpu_custom_call.1} parent=1 // pred_region
      %s30 = ssub.s32 64, 64
      %31 = vsyncadd [#allocation4], %s30
      %s33 = sshll.u32 [#allocation5], 4
      %s34 = int_to_ptr.vmem [resolvable:$true] %s33
      %36 = dma.vmem_to_hbm [thread:$0]  %s34, 64, %s1, [#allocation4]
    $region13: #{tpu_custom_call.1} parent=1 // pred_fallthru
      _
    // Predicated region
    $region14: #{tpu_custom_call.1} parent=1 // pred_check
      _
    $region15: #{tpu_custom_call.1} parent=1 // pred_check_branch
      %38 = sbr.rel (0) target = $region17
    $region16: #{tpu_custom_call.1} parent=1 // pred_region
      %39 = dma.done [#allocation4], 64
    $region17: #{tpu_custom_call.1} parent=1 // pred_fallthru
      _
    %40 = vsyncpa [#allocation3], 1
    %41 = vsyncpa [#allocation4], 1

</llo_original>
